<compile_context>
chip_gen: v7x
topology: tpu7x:2x2x1
jax: 0.10.0
libtpu: 0.0.40
codegen_flags: <defaults>
</compile_context>

<pallas_src>
import math

import jax
import jax.numpy as jnp
from jax.experimental import pallas as pl
from jax.experimental.pallas import tpu as pltpu

# quint8 range (torch.quint8)
QMIN = 0.0
QMAX = 255.0

LANES = 512            # lane-dense output width (multiple of 128)
MAX_BLOCK_ROWS = 1024  # 1024x512 f32 tile = 2 MiB; 3 arrays x 2 bufs = 12 MiB
TARGET_GRID_STEPS = 4  # pipeline depth + keep both v7x TensorCores busy


def quantized_add_kernel(params_ref, l_ref, r_ref, o_ref):
    # params (SMEM, f32[11]):
    #   [inv_sl, lo_l, hi_l, sl/so,   inv_sr, lo_r, hi_r, sr/so,   lo_o, hi_o, so]
    inv_sl, lo_l, hi_l, rl = (params_ref[0], params_ref[1],
                              params_ref[2], params_ref[3])
    inv_sr, lo_r, hi_r, rr = (params_ref[4], params_ref[5],
                              params_ref[6], params_ref[7])
    lo_o, hi_o, so = params_ref[8], params_ref[9], params_ref[10]

    # quantize_per_tensor with the zero point folded into the clamp bounds
    # (bit-equivalent for integer zero points): centered integer code.
    ql = jnp.clip(jnp.round(l_ref[...] * inv_sl), lo_l, hi_l)
    qr = jnp.clip(jnp.round(r_ref[...] * inv_sr), lo_r, hi_r)

    # quantized::add: dequant + add + requant, with the dequant scales folded
    # into the requant reciprocal (sl/so, sr/so) -> one less vmul per element.
    t = ql * rl + qr * rr

    # output requant (zp folded into bounds) + DeQuantize()
    o_ref[...] = (jnp.clip(jnp.round(t), lo_o, hi_o) * so).astype(o_ref.dtype)


def _make_params(scale_l, zp_l, scale_r, zp_r, scale_o, zp_o):
    # Folding zero points into clamp bounds is exact only for integer zps.
    for name, zp in (("zp_l", zp_l), ("zp_r", zp_r), ("zp_o", zp_o)):
        if float(zp) != float(int(zp)):
            raise ValueError(f"{name} must be an integer zero point, got {zp}")
    return jnp.array(
        [1.0 / scale_l, QMIN - zp_l, QMAX - zp_l, scale_l / scale_o,
         1.0 / scale_r, QMIN - zp_r, QMAX - zp_r, scale_r / scale_o,
         QMIN - zp_o, QMAX - zp_o, scale_o],
        dtype=jnp.float32)


def _plan_tiling(total_elems):
    """Rows (padded) and block_rows for a (rows, LANES) lane-dense slab."""
    rows = math.ceil(total_elems / LANES)
    # Aim for >= TARGET_GRID_STEPS grid steps so the BlockSpec pipeline has
    # depth and (on v7x) both cores get work; cap the tile so the live VMEM
    # footprint (3 arrays x 2 buffers) stays well under v5e's 16 MiB default.
    br = math.ceil(math.ceil(rows / TARGET_GRID_STEPS) / 8) * 8
    br = max(8, min(MAX_BLOCK_ROWS, br))
    rows_padded = math.ceil(rows / br) * br
    return rows_padded, br


def quantized_add(left, right, *, scale_l, zp_l, scale_r, zp_r, scale_o, zp_o):
    assert left.shape == right.shape
    orig_shape = left.shape
    total = int(left.size)

    params = _make_params(scale_l, zp_l, scale_r, zp_r, scale_o, zp_o)

    rows_padded, block_rows = _plan_tiling(total)
    padded_total = rows_padded * LANES
    pad = padded_total - total

    lf = jnp.pad(left.reshape(-1), (0, pad)).reshape(rows_padded, LANES)
    rf = jnp.pad(right.reshape(-1), (0, pad)).reshape(rows_padded, LANES)

    grid = (rows_padded // block_rows,)

    out2 = pl.pallas_call(
        quantized_add_kernel,
        out_shape=jax.ShapeDtypeStruct((rows_padded, LANES), jnp.float32),
        grid_spec=pltpu.PrefetchScalarGridSpec(
            num_scalar_prefetch=0,
            grid=grid,
            in_specs=[
                # Tiny quantization-parameter table resident in SMEM; changing
                # qparams does not trigger a Mosaic recompile.
                pl.BlockSpec(memory_space=pltpu.MemorySpace.SMEM),
                pl.BlockSpec((block_rows, LANES), lambda i: (i, 0)),
                pl.BlockSpec((block_rows, LANES), lambda i: (i, 0)),
            ],
            out_specs=pl.BlockSpec((block_rows, LANES), lambda i: (i, 0)),
        ),
        compiler_params=pltpu.CompilerParams(
            dimension_semantics=("parallel",),
            vmem_limit_bytes=32 * 1024 * 1024),
        cost_estimate=pl.CostEstimate(
            flops=12 * padded_total,
            transcendentals=0,
            bytes_accessed=3 * 4 * padded_total),
    )(params, lf, rf)

    return out2.reshape(-1)[:total].reshape(orig_shape)


def _reference(left, right, params):
    # Pure-JAX reference with the identical folded constants / op graph, so it
    # matches the kernel except (at worst) at round-half-even boundary ties.
    inv_sl, lo_l, hi_l, rl = params[0], params[1], params[2], params[3]
    inv_sr, lo_r, hi_r, rr = params[4], params[5], params[6], params[7]
    lo_o, hi_o, so = params[8], params[9], params[10]
    ql = jnp.clip(jnp.round(left * inv_sl), lo_l, hi_l)
    qr = jnp.clip(jnp.round(right * inv_sr), lo_r, hi_r)
    return jnp.clip(jnp.round(ql * rl + qr * rr), lo_o, hi_o) * so


if __name__ == "__main__":
    key = jax.random.PRNGKey(0)
    k1, k2 = jax.random.split(key)

    # Small NCHW inputs consistent with an elementwise quantized-add test.
    shape = (2, 4, 16, 16)
    left = jax.random.uniform(k1, shape, jnp.float32, minval=-1.0, maxval=6.0)
    right = jax.random.uniform(k2, shape, jnp.float32, minval=-1.0, maxval=6.0)

    # quint8 params with integer zero points.  scale_o = 0.07 is deliberately
    # not lattice-aligned with the input scales, so the requantization never
    # lands exactly on a round-half-even tie and the kernel/reference agree.
    qparams = dict(scale_l=0.05, zp_l=3,
                   scale_r=0.04, zp_r=5,
                   scale_o=0.07, zp_o=2)

    out = quantized_add(left, right, **qparams)
    jax.block_until_ready(out)

    assert out.shape == shape and out.dtype == jnp.float32

    params = _make_params(**qparams)
    ref = _reference(left, right, params)
    diff = jnp.abs(out - ref)

    # Hard check: kernel and reference may disagree by at most one output
    # quantization step (a rounding tie resolved differently by codegen).
    assert bool(jnp.all(diff <= qparams["scale_o"] + 1e-5)), \
        "kernel mismatch vs reference (more than one quantization step)"
    # Soft check: with the non-aligned scales above, essentially every element
    # should match bit-for-bit; tolerate a tiny number of boundary flips.
    assert float(jnp.mean((diff > 1e-4).astype(jnp.float32))) < 0.02, \
        "too many rounding-boundary mismatches vs reference"

    print("KERNEL_OK")
</pallas_src>

<mosaic_0001>
module attributes {stable_mosaic.version = 11 : i64} {
  func.func @quantized_add_kernel(%arg0: i32, %arg1: memref<11xf32, #tpu.memory_space<smem>>, %arg2: memref<8x512xf32, #tpu.memory_space<vmem>>, %arg3: memref<8x512xf32, #tpu.memory_space<vmem>>, %arg4: memref<8x512xf32, #tpu.memory_space<vmem>>) attributes {dimension_semantics = [#tpu.dimension_semantics<parallel>], iteration_bounds = array<i64: 1>, scalar_prefetch = 0 : i64, scratch_operands = 0 : i64, tpu.core_type = #tpu.core_type<tc>, window_params = [{transform_indices = @transform_0, window_bounds = array<i64: 11>}, {transform_indices = @transform_1, window_bounds = array<i64: 8, 512>}, {transform_indices = @transform_2, window_bounds = array<i64: 8, 512>}, {transform_indices = @transform_3, window_bounds = array<i64: 8, 512>}]} {
    %c0 = arith.constant 0 : index
    %0 = memref.load %arg1[%c0] : memref<11xf32, #tpu.memory_space<smem>>
    %c1 = arith.constant 1 : index
    %1 = memref.load %arg1[%c1] : memref<11xf32, #tpu.memory_space<smem>>
    %c2 = arith.constant 2 : index
    %2 = memref.load %arg1[%c2] : memref<11xf32, #tpu.memory_space<smem>>
    %c3 = arith.constant 3 : index
    %3 = memref.load %arg1[%c3] : memref<11xf32, #tpu.memory_space<smem>>
    %c4 = arith.constant 4 : index
    %4 = memref.load %arg1[%c4] : memref<11xf32, #tpu.memory_space<smem>>
    %c5 = arith.constant 5 : index
    %5 = memref.load %arg1[%c5] : memref<11xf32, #tpu.memory_space<smem>>
    %c6 = arith.constant 6 : index
    %6 = memref.load %arg1[%c6] : memref<11xf32, #tpu.memory_space<smem>>
    %c7 = arith.constant 7 : index
    %7 = memref.load %arg1[%c7] : memref<11xf32, #tpu.memory_space<smem>>
    %c8 = arith.constant 8 : index
    %8 = memref.load %arg1[%c8] : memref<11xf32, #tpu.memory_space<smem>>
    %c9 = arith.constant 9 : index
    %9 = memref.load %arg1[%c9] : memref<11xf32, #tpu.memory_space<smem>>
    %c10 = arith.constant 10 : index
    %10 = memref.load %arg1[%c10] : memref<11xf32, #tpu.memory_space<smem>>
    %c0_0 = arith.constant 0 : index
    %c0_1 = arith.constant 0 : index
    %11 = vector.load %arg2[%c0_0, %c0_1] : memref<8x512xf32, #tpu.memory_space<vmem>>, vector<8x512xf32>
    %12 = vector.broadcast %0 : f32 to vector<8x512xf32>
    %13 = arith.mulf %11, %12 : vector<8x512xf32>
    %14 = math.roundeven %13 : vector<8x512xf32>
    %15 = vector.broadcast %1 : f32 to vector<8x512xf32>
    %16 = arith.maximumf %15, %14 : vector<8x512xf32>
    %17 = vector.broadcast %2 : f32 to vector<8x512xf32>
    %18 = arith.minimumf %17, %16 : vector<8x512xf32>
    %c0_2 = arith.constant 0 : index
    %c0_3 = arith.constant 0 : index
    %19 = vector.load %arg3[%c0_2, %c0_3] : memref<8x512xf32, #tpu.memory_space<vmem>>, vector<8x512xf32>
    %20 = vector.broadcast %4 : f32 to vector<8x512xf32>
    %21 = arith.mulf %19, %20 : vector<8x512xf32>
    %22 = math.roundeven %21 : vector<8x512xf32>
    %23 = vector.broadcast %5 : f32 to vector<8x512xf32>
    %24 = arith.maximumf %23, %22 : vector<8x512xf32>
    %25 = vector.broadcast %6 : f32 to vector<8x512xf32>
    %26 = arith.minimumf %25, %24 : vector<8x512xf32>
    %27 = vector.broadcast %3 : f32 to vector<8x512xf32>
    %28 = arith.mulf %18, %27 : vector<8x512xf32>
    %29 = vector.broadcast %7 : f32 to vector<8x512xf32>
    %30 = arith.mulf %26, %29 : vector<8x512xf32>
    %31 = arith.addf %28, %30 : vector<8x512xf32>
    %32 = math.roundeven %31 : vector<8x512xf32>
    %33 = vector.broadcast %8 : f32 to vector<8x512xf32>
    %34 = arith.maximumf %33, %32 : vector<8x512xf32>
    %35 = vector.broadcast %9 : f32 to vector<8x512xf32>
    %36 = arith.minimumf %35, %34 : vector<8x512xf32>
    %37 = vector.broadcast %10 : f32 to vector<8x512xf32>
    %38 = arith.mulf %36, %37 : vector<8x512xf32>
    %c0_4 = arith.constant 0 : index
    %c0_5 = arith.constant 0 : index
    %39 = vector.load %arg4[%c0_4, %c0_5] : memref<8x512xf32, #tpu.memory_space<vmem>>, vector<8x512xf32>
    tpu.vector_store %arg4[%c0_4, %c0_5], %38 {strides = array<i32>} : memref<8x512xf32, #tpu.memory_space<vmem>>, vector<8x512xf32>,
    return
  }
  func.func @transform_0(%arg0: i32) -> i32 {
    %c0_i32 = arith.constant 0 : i32
    %c0_i32_0 = arith.constant 0 : i32
    return %c0_i32 : i32
  }
  func.func @transform_1(%arg0: i32) -> (i32, i32) {
    %c0_i32 = arith.constant 0 : i32
    %c0_i32_0 = arith.constant 0 : i32
    return %arg0, %c0_i32 : i32, i32
  }
  func.func @transform_2(%arg0: i32) -> (i32, i32) {
    %c0_i32 = arith.constant 0 : i32
    %c0_i32_0 = arith.constant 0 : i32
    return %arg0, %c0_i32 : i32, i32
  }
  func.func @transform_3(%arg0: i32) -> (i32, i32) {
    %c0_i32 = arith.constant 0 : i32
    %c0_i32_0 = arith.constant 0 : i32
    return %arg0, %c0_i32 : i32, i32
  }
}

</mosaic_0001>

<llo_original>
// kernel: tpu_custom_call.1
$region0: #{tpu_custom_call.1}
  #allocation0 [shape = 'u32[]', space=smem, size = 0x4, offset = 0x4, fixed_abs, tag = 'smem constant byte address 0x4 - core index']
  #allocation1 [shape = 'u32[144,128]{1,0:T(1,128)}', space=vmem, size = 0x12000, scoped, tag = 'internal scratch']
  %s0 = inlined_call_operand.hbm [shape: f32[11], index: 0, kind: input, shape index: {}]
  %s1 = inlined_call_operand.hbm [shape: f32[8,512], index: 1, kind: input, shape index: {}]
  %s2 = inlined_call_operand.hbm [shape: f32[8,512], index: 2, kind: input, shape index: {}]
  %s3 = inlined_call_operand.hbm [shape: f32[8,512], index: 3, kind: output, shape index: {}]
  %s4 = sld [smem:[#allocation0]]
  $region34: #{tpu_custom_call.1} parent=0
    _
  %s6 = ssub.s32 1, %s4
  %s7 = scalar_select 0, %s6, %s4
  $region1: #{tpu_custom_call.1} parent=0
    #allocation2 [shape = 'u8[512]{0}', space=smem, size = 0x200, scoped, tag = 'input window, operand 0, single buffered']
    #allocation3 [shape = 's32[1]{0}', space=sflag, size = 0x4, scoped, tag = 'scoped memory for tpu_custom_call.1']
    #allocation4 [shape = 's32[1]{0}', space=sflag, size = 0x4, scoped, tag = 'scoped memory for tpu_custom_call.1']
    #allocation5 [shape = 's32[1]{0}', space=sflag, size = 0x4, scoped, tag = 'scoped memory for tpu_custom_call.1']
    #allocation6 [shape = 'u8[16384]{0}', space=vmem, size = 0x4000, scoped, tag = 'input window, operand 1, single buffered']
    #allocation7 [shape = 'u8[16384]{0}', space=vmem, size = 0x4000, scoped, tag = 'input window, operand 2, single buffered']
    #allocation8 [shape = 's32[1]{0}', space=sflag, size = 0x4, scoped, tag = 'scoped memory for tpu_custom_call.1']
    #allocation9 [shape = 'u8[16384]{0}', space=vmem, size = 0x4000, scoped, tag = 'output window, operand 0, single buffered']
    %8 = vsyncpa [#allocation5], 0
    %9 = vsyncpa [#allocation3], 0
    %10 = vsyncpa [#allocation8], 0
    %11 = vsyncpa [#allocation4], 0
    // Predicated region
    $region2: #{tpu_custom_call.1} parent=1 // pred_check
      _
    $region3: #{tpu_custom_call.1} parent=1 // pred_check_branch
      %13 = sbr.rel (0) target = $region5
    $region4: #{tpu_custom_call.1} parent=1 // pred_region
      %s15 = ssub.s32 16, 16
      %16 = vsyncadd [#allocation5], %s15
      %19 = dma.hbm_to_smem %s0, 16, [#allocation2], [#allocation5]
    $region5: #{tpu_custom_call.1} parent=1 // pred_fallthru
      _
    // Predicated region
    $region6: #{tpu_custom_call.1} parent=1 // pred_check
      _
    $region7: #{tpu_custom_call.1} parent=1 // pred_check_branch
      %21 = sbr.rel (0) target = $region9
    $region8: #{tpu_custom_call.1} parent=1 // pred_region
      %s23 = ssub.s32 512, 512
      %24 = vsyncadd [#allocation3], %s23
      %s26 = sshll.u32 [#allocation6], 4
      %s27 = int_to_ptr.vmem [resolvable:$true] %s26
      %29 = dma.hbm_to_vmem [thread:$0]  %s1, 512, %s27, [#allocation3]
    $region9: #{tpu_custom_call.1} parent=1 // pred_fallthru
      _
    // Predicated region
    $region10: #{tpu_custom_call.1} parent=1 // pred_check
      _
    $region11: #{tpu_custom_call.1} parent=1 // pred_check_branch
      %31 = sbr.rel (0) target = $region13
    $region12: #{tpu_custom_call.1} parent=1 // pred_region
      %s33 = ssub.s32 512, 512
      %34 = vsyncadd [#allocation8], %s33
      %s36 = sshll.u32 [#allocation7], 4
      %s37 = int_to_ptr.vmem [resolvable:$true] %s36
      %39 = dma.hbm_to_vmem [thread:$0]  %s2, 512, %s37, [#allocation8]
    $region13: #{tpu_custom_call.1} parent=1 // pred_fallthru
      _
    // Predicated region
    $region14: #{tpu_custom_call.1} parent=1 // pred_check
      _
    $region15: #{tpu_custom_call.1} parent=1 // pred_check_branch
      %41 = sbr.rel (0) target = $region17
    $region16: #{tpu_custom_call.1} parent=1 // pred_region
      %42 = dma.done [#allocation5], 16
    $region17: #{tpu_custom_call.1} parent=1 // pred_fallthru
      _
    // Predicated region
    $region18: #{tpu_custom_call.1} parent=1 // pred_check
      _
    $region19: #{tpu_custom_call.1} parent=1 // pred_check_branch
      %44 = sbr.rel (0) target = $region21
    $region20: #{tpu_custom_call.1} parent=1 // pred_region
      %45 = dma.done [#allocation3], 512
    $region21: #{tpu_custom_call.1} parent=1 // pred_fallthru
      _
    // Predicated region
    $region22: #{tpu_custom_call.1} parent=1 // pred_check
      _
    $region23: #{tpu_custom_call.1} parent=1 // pred_check_branch
      %47 = sbr.rel (0) target = $region25
    $region24: #{tpu_custom_call.1} parent=1 // pred_region
      %48 = dma.done [#allocation8], 512
    $region25: #{tpu_custom_call.1} parent=1 // pred_fallthru
      _
    %49 = sfence
    %s50 = sld [smem:[#allocation2]]
    %s51 = sld [smem:[#allocation2 + $0x1]]
    %s52 = sld [smem:[#allocation2 + $0x2]]
    %s53 = sld [smem:[#allocation2 + $0x3]]
    %s54 = sld [smem:[#allocation2 + $0x4]]
    %s55 = sld [smem:[#allocation2 + $0x5]]
    %s56 = sld [smem:[#allocation2 + $0x6]]
    %s57 = sld [smem:[#allocation2 + $0x7]]
    %s58 = sld [smem:[#allocation2 + $0x8]]
    %s59 = sld [smem:[#allocation2 + $0x9]]
    %s60 = sld [smem:[#allocation2 + $0xa]]
    %v61 = vld [vmem:[#allocation6] sm:$0xff]
    %v62 = vld [vmem:[#allocation6 + $0x8] sm:$0xff]
    %v63 = vld [vmem:[#allocation6 + $0x10] sm:$0xff]
    %v64 = vld [vmem:[#allocation6 + $0x18] sm:$0xff]
    %v65 = vstv %s50
    %v66 = vmul.f32 %v61, %v65
    %v67 = vmul.f32 %v62, %v65
    %v68 = vmul.f32 %v63, %v65
    %v69 = vmul.f32 %v64, %v65
    %v70 = vround.ne.pseudo %v66
    %v71 = vround.ne.pseudo %v67
    %v72 = vround.ne.pseudo %v68
    %v73 = vround.ne.pseudo %v69
    %v74 = vstv %s51
    %v75 = vmax.f32 %v74, %v70
    %v76 = vmax.f32 %v74, %v71
    %v77 = vmax.f32 %v74, %v72
    %v78 = vmax.f32 %v74, %v73
    %v79 = vstv %s52
    %v80 = vmin.f32 %v79, %v75
    %v81 = vmin.f32 %v79, %v76
    %v82 = vmin.f32 %v79, %v77
    %v83 = vmin.f32 %v79, %v78
    %v84 = vld [vmem:[#allocation7] sm:$0xff]
    %v85 = vld [vmem:[#allocation7 + $0x8] sm:$0xff]
    %v86 = vld [vmem:[#allocation7 + $0x10] sm:$0xff]
    %v87 = vld [vmem:[#allocation7 + $0x18] sm:$0xff]
    %v88 = vstv %s54
    %v89 = vmul.f32 %v84, %v88
    %v90 = vmul.f32 %v85, %v88
    %v91 = vmul.f32 %v86, %v88
    %v92 = vmul.f32 %v87, %v88
    %v93 = vround.ne.pseudo %v89
    %v94 = vround.ne.pseudo %v90
    %v95 = vround.ne.pseudo %v91
    %v96 = vround.ne.pseudo %v92
    %v97 = vstv %s55
    %v98 = vmax.f32 %v97, %v93
    %v99 = vmax.f32 %v97, %v94
    %v100 = vmax.f32 %v97, %v95
    %v101 = vmax.f32 %v97, %v96
    %v102 = vstv %s56
    %v103 = vmin.f32 %v102, %v98
    %v104 = vmin.f32 %v102, %v99
    %v105 = vmin.f32 %v102, %v100
    %v106 = vmin.f32 %v102, %v101
    %v107 = vstv %s53
    %v108 = vmul.f32 %v80, %v107
    %v109 = vmul.f32 %v81, %v107
    %v110 = vmul.f32 %v82, %v107
    %v111 = vmul.f32 %v83, %v107
    %v112 = vstv %s57
    %v113 = vmul.f32 %v103, %v112
    %v114 = vmul.f32 %v104, %v112
    %v115 = vmul.f32 %v105, %v112
    %v116 = vmul.f32 %v106, %v112
    %v117 = vadd.f32 %v108, %v113
    %v118 = vadd.f32 %v109, %v114
    %v119 = vadd.f32 %v110, %v115
    %v120 = vadd.f32 %v111, %v116
    %v121 = vround.ne.pseudo %v117
    %v122 = vround.ne.pseudo %v118
    %v123 = vround.ne.pseudo %v119
    %v124 = vround.ne.pseudo %v120
    %v125 = vstv %s58
    %v126 = vmax.f32 %v125, %v121
    %v127 = vmax.f32 %v125, %v122
    %v128 = vmax.f32 %v125, %v123
    %v129 = vmax.f32 %v125, %v124
    %v130 = vstv %s59
    %v131 = vmin.f32 %v130, %v126
    %v132 = vmin.f32 %v130, %v127
    %v133 = vmin.f32 %v130, %v128
    %v134 = vmin.f32 %v130, %v129
    %v135 = vstv %s60
    %v136 = vmul.f32 %v131, %v135
    %v137 = vmul.f32 %v132, %v135
    %v138 = vmul.f32 %v133, %v135
    %v139 = vmul.f32 %v134, %v135
    %140 = vst [vmem:[#allocation9] sm:$0xff] %v136
    %141 = vst [vmem:[#allocation9 + $0x8] sm:$0xff] %v137
    %142 = vst [vmem:[#allocation9 + $0x10] sm:$0xff] %v138
    %143 = vst [vmem:[#allocation9 + $0x18] sm:$0xff] %v139
    // Predicated region
    $region26: #{tpu_custom_call.1} parent=1 // pred_check
      _
    $region27: #{tpu_custom_call.1} parent=1 // pred_check_branch
      %145 = sbr.rel (0) target = $region29
    $region28: #{tpu_custom_call.1} parent=1 // pred_region
      %s147 = ssub.s32 512, 512
      %148 = vsyncadd [#allocation4], %s147
      %s150 = sshll.u32 [#allocation9], 4
      %s151 = int_to_ptr.vmem [resolvable:$true] %s150
      %153 = dma.vmem_to_hbm [thread:$0]  %s151, 512, %s3, [#allocation4]
    $region29: #{tpu_custom_call.1} parent=1 // pred_fallthru
      _
    // Predicated region
    $region30: #{tpu_custom_call.1} parent=1 // pred_check
      _
    $region31: #{tpu_custom_call.1} parent=1 // pred_check_branch
      %155 = sbr.rel (0) target = $region33
    $region32: #{tpu_custom_call.1} parent=1 // pred_region
      %156 = dma.done [#allocation4], 512
    $region33: #{tpu_custom_call.1} parent=1 // pred_fallthru
      _
    %157 = vsyncpa [#allocation3], 1
    %158 = vsyncpa [#allocation8], 1
    %159 = vsyncpa [#allocation4], 1
    %160 = vsyncpa [#allocation5], 1

</llo_original>
